<compile_context>
chip_gen: v6e
topology: v6e:2x2x1
jax: 0.10.0
libtpu: 0.0.40
codegen_flags: <defaults>
</compile_context>

<pallas_src>
import functools

import jax
import jax.numpy as jnp
from jax.experimental import pallas as pl
from jax.experimental.pallas import tpu as pltpu


_TARGET_BLOCK_BYTES = 2 * 1024 * 1024    # ~2 MiB per input block
_MAX_LANE_COLS = 2048                    # cap on lane-axis block width
_VMEM_LIMIT_BYTES = 48 * 1024 * 1024     # fits v5e/v6e (128 MiB) and v7x (64 MiB)


def _choose_col_tile(ncols):
    """Lane (last-dim) tile: full extent if small, else a multiple of 128."""
    if ncols <= _MAX_LANE_COLS:
        return ncols
    return (_MAX_LANE_COLS // 128) * 128


def _choose_row_tile(nrows, tc, dtype_bytes):
    """Sublane tile sized so one input block is ~_TARGET_BLOCK_BYTES."""
    row_bytes = max(tc * dtype_bytes, 1)
    tr = int(min(_TARGET_BLOCK_BYTES // row_bytes, nrows))
    if tr >= 8:
        tr = (tr // 8) * 8
    else:
        tr = nrows                        # block == full dim is allowed
    # Prefer >=2 grid steps when there is enough data (v7x megacore sharding).
    if tr >= nrows and nrows >= 16:
        tr = max(8, ((nrows // 2) // 8) * 8)
    return tr


def _add_kernel(x_ref, y_ref, o_ref):
    o_ref[...] = x_ref[...] + y_ref[...]


def _scaled_add_kernel(tr, x_ref, y_ref, sx_ref, sy_ref, o_ref):
    # sx_ref / sy_ref hold the whole per-row scale vector (resident in VMEM);
    # slice out this block's rows.
    r0 = pl.multiple_of(pl.program_id(0) * tr, tr)
    sx = sx_ref[pl.ds(r0, tr), :]
    sy = sy_ref[pl.ds(r0, tr), :]
    xf = x_ref[...].astype(jnp.float32)
    yf = y_ref[...].astype(jnp.float32)
    o_ref[...] = (xf * sx + yf * sy).astype(o_ref.dtype)


def _pallas_add_2d(x2, y2):
    R, Cdim = x2.shape
    tc = _choose_col_tile(Cdim)
    tr = _choose_row_tile(R, tc, x2.dtype.itemsize)
    grid = (pl.cdiv(R, tr), pl.cdiv(Cdim, tc))
    data_spec = pl.BlockSpec((tr, tc), lambda i, j: (i, j))
    return pl.pallas_call(
        _add_kernel,
        out_shape=jax.ShapeDtypeStruct((R, Cdim), x2.dtype),
        grid_spec=pltpu.PrefetchScalarGridSpec(
            num_scalar_prefetch=0,
            grid=grid,
            in_specs=[data_spec, data_spec],
            out_specs=pl.BlockSpec((tr, tc), lambda i, j: (i, j)),
        ),
        compiler_params=pltpu.CompilerParams(
            dimension_semantics=("parallel", "parallel"),
            vmem_limit_bytes=_VMEM_LIMIT_BYTES,
        ),
    )(x2, y2)


@functools.partial(jax.jit, static_argnames=("enable",))
def eltwise_forward(x, y, scale_x=None, scale_y=None, *, enable=False):
    """Pallas implementation of EltWiseModule.forward.

    x, y: (N, C, H, W) arrays (same shape / dtype).
    scale_x, scale_y: per-channel (C,) arrays, required when enable=True.
    """
    assert x.shape == y.shape and x.dtype == y.dtype
    N, C, H, W = x.shape

    if not enable:
        # Scale-free streaming add on a lane-dense flattening.
        total = N * C * H * W
        L = None
        for cand in (4096, 2048, 1024, 512, 256, 128):
            if total % cand == 0 and total // cand >= 8:
                L = cand
                break
        if L is None:
            for cand in (4096, 2048, 1024, 512, 256, 128):
                if total % cand == 0:
                    L = cand
                    break
        if L is None:
            # total not a multiple of 128: keep (N*C, H*W) layout (still correct,
            # last lane block uses masked stores).
            x2 = x.reshape(N * C, H * W)
            y2 = y.reshape(N * C, H * W)
        else:
            x2 = x.reshape(total // L, L)
            y2 = y.reshape(total // L, L)
        out2 = _pallas_add_2d(x2, y2)
        return out2.reshape(N, C, H, W)

    if scale_x is None or scale_y is None:
        raise ValueError("enable=True requires scale_x and scale_y")

    R = N * C
    HW = H * W
    x2 = x.reshape(R, HW)
    y2 = y.reshape(R, HW)

    tc = _choose_col_tile(HW)
    tr = _choose_row_tile(R, tc, x.dtype.itemsize)
    grid_r = pl.cdiv(R, tr)
    grid_c = pl.cdiv(HW, tc)
    r_pad = grid_r * tr

    # Per-(batch, channel)-row scales, kept in f32, padded to the row grid so
    # the in-kernel slice never runs out of bounds.
    sx_rows = jnp.broadcast_to(scale_x.astype(jnp.float32)[None, :], (N, C)).reshape(R)
    sy_rows = jnp.broadcast_to(scale_y.astype(jnp.float32)[None, :], (N, C)).reshape(R)
    sx2 = jnp.pad(sx_rows, (0, r_pad - R), constant_values=1.0).reshape(r_pad, 1)
    sy2 = jnp.pad(sy_rows, (0, r_pad - R), constant_values=1.0).reshape(r_pad, 1)

    data_spec = pl.BlockSpec((tr, tc), lambda i, j: (i, j))
    # Whole scale vector resident in VMEM (tiny), DMA'd once across the grid.
    scale_spec = pl.BlockSpec((r_pad, 1), lambda i, j: (0, 0))

    out2 = pl.pallas_call(
        functools.partial(_scaled_add_kernel, tr),
        out_shape=jax.ShapeDtypeStruct((R, HW), x.dtype),
        grid_spec=pltpu.PrefetchScalarGridSpec(
            num_scalar_prefetch=0,
            grid=(grid_r, grid_c),
            in_specs=[data_spec, data_spec, scale_spec, scale_spec],
            out_specs=pl.BlockSpec((tr, tc), lambda i, j: (i, j)),
        ),
        compiler_params=pltpu.CompilerParams(
            dimension_semantics=("parallel", "parallel"),
            vmem_limit_bytes=_VMEM_LIMIT_BYTES,
        ),
    )(x2, y2, sx2, sy2)
    return out2.reshape(N, C, H, W)


if __name__ == "__main__":
    key = jax.random.PRNGKey(0)
    k1, k2, k3, k4 = jax.random.split(key, 4)

    N, C, H, W = 2, 4, 16, 16
    x = jax.random.normal(k1, (N, C, H, W), dtype=jnp.float32)
    y = jax.random.normal(k2, (N, C, H, W), dtype=jnp.float32)

    # Default path (enable=False): out = x + y
    out = eltwise_forward(x, y, enable=False)
    out = jax.block_until_ready(out)
    ref = x + y
    assert jnp.allclose(out, ref, atol=1e-6, rtol=1e-6)

    # Quantization-enabled path: per-channel scales (synthetic stand-in for the
    # coordinate() output; no checkpoint / global_buffer).
    scale_x = jax.random.uniform(k3, (C,), minval=0.5, maxval=1.5, dtype=jnp.float32)
    scale_y = jax.random.uniform(k4, (C,), minval=0.5, maxval=1.5, dtype=jnp.float32)
    out_q = eltwise_forward(x, y, scale_x, scale_y, enable=True)
    out_q = jax.block_until_ready(out_q)
    ref_q = x * scale_x.reshape(1, C, 1, 1) + y * scale_y.reshape(1, C, 1, 1)
    assert jnp.allclose(out_q, ref_q, atol=1e-5, rtol=1e-5)

    print("KERNEL_OK")
</pallas_src>

<mosaic_0001>
module attributes {stable_mosaic.version = 11 : i64} {
  func.func @_add_kernel(%arg0: i32, %arg1: i32, %arg2: memref<8x256xf32, #tpu.memory_space<vmem>>, %arg3: memref<8x256xf32, #tpu.memory_space<vmem>>, %arg4: memref<8x256xf32, #tpu.memory_space<vmem>>) attributes {dimension_semantics = [#tpu.dimension_semantics<parallel>, #tpu.dimension_semantics<parallel>], iteration_bounds = array<i64: 1, 1>, scalar_prefetch = 0 : i64, scratch_operands = 0 : i64, tpu.core_type = #tpu.core_type<tc>, window_params = [{transform_indices = @transform_0, window_bounds = array<i64: 8, 256>}, {transform_indices = @transform_1, window_bounds = array<i64: 8, 256>}, {transform_indices = @transform_2, window_bounds = array<i64: 8, 256>}]} {
    %c0 = arith.constant 0 : index
    %c0_0 = arith.constant 0 : index
    %0 = vector.load %arg2[%c0, %c0_0] : memref<8x256xf32, #tpu.memory_space<vmem>>, vector<8x256xf32>
    %c0_1 = arith.constant 0 : index
    %c0_2 = arith.constant 0 : index
    %1 = vector.load %arg3[%c0_1, %c0_2] : memref<8x256xf32, #tpu.memory_space<vmem>>, vector<8x256xf32>
    %2 = arith.addf %0, %1 : vector<8x256xf32>
    %c0_3 = arith.constant 0 : index
    %c0_4 = arith.constant 0 : index
    %3 = vector.load %arg4[%c0_3, %c0_4] : memref<8x256xf32, #tpu.memory_space<vmem>>, vector<8x256xf32>
    tpu.vector_store %arg4[%c0_3, %c0_4], %2 {strides = array<i32>} : memref<8x256xf32, #tpu.memory_space<vmem>>, vector<8x256xf32>,
    return
  }
  func.func @transform_0(%arg0: i32, %arg1: i32) -> (i32, i32) {
    %c0_i32 = arith.constant 0 : i32
    return %arg0, %arg1 : i32, i32
  }
  func.func @transform_1(%arg0: i32, %arg1: i32) -> (i32, i32) {
    %c0_i32 = arith.constant 0 : i32
    return %arg0, %arg1 : i32, i32
  }
  func.func @transform_2(%arg0: i32, %arg1: i32) -> (i32, i32) {
    %c0_i32 = arith.constant 0 : i32
    return %arg0, %arg1 : i32, i32
  }
}

</mosaic_0001>

<llo_original>
// kernel: eltwise_forward.1
$region0: #{eltwise_forward.1}
  #allocation0 [shape = 'u32[]', space=smem, size = 0x4, offset = 0x4, fixed_abs, tag = 'smem constant byte address 0x4 - core index']
  #allocation1 [shape = 'u32[144,128]{1,0:T(1,128)}', space=vmem, size = 0x12000, scoped, tag = 'internal scratch']
  %s0 = inlined_call_operand.vmem [shape: f32[8,256], index: 0, kind: input, shape index: {}]
  %s1 = inlined_call_operand.vmem [shape: f32[8,256], index: 1, kind: input, shape index: {}]
  %s2 = inlined_call_operand.vmem [shape: f32[8,256], index: 2, kind: output, shape index: {}]
  %s3 = sld [smem:[#allocation0]]
  $region18: #{eltwise_forward.1} parent=0
    _
  %s5 = ssub.s32 1, %s3
  %s6 = scalar_select 0, %s5, %s3
  // Predicated region
  $region2: #{eltwise_forward.1} parent=0 // pred_check
    _
  $region3: #{eltwise_forward.1} parent=0 // pred_check_branch
    %8 = sbr.rel (0) target = $region5
  $region4: #{eltwise_forward.1} parent=0 // pred_region
    _
  $region5: #{eltwise_forward.1} parent=0 // pred_fallthru
    _
  // Predicated region
  $region6: #{eltwise_forward.1} parent=0 // pred_check
    _
  $region7: #{eltwise_forward.1} parent=0 // pred_check_branch
    %10 = sbr.rel (0) target = $region9
  $region8: #{eltwise_forward.1} parent=0 // pred_region
    _
  $region9: #{eltwise_forward.1} parent=0 // pred_fallthru
    _
  %v11 = vld [vmem:[%s0] sm:$0xff]
  %v12 = vld [vmem:[%s0 + $0x8] sm:$0xff]
  %v13 = vld [vmem:[%s1] sm:$0xff]
  %v14 = vld [vmem:[%s1 + $0x8] sm:$0xff]
  %v15 = vadd.f32 %v11, %v13
  %v16 = vadd.f32 %v12, %v14
  %17 = vst [vmem:[%s2] sm:$0xff] %v15
  %18 = vst [vmem:[%s2 + $0x8] sm:$0xff] %v16
  // Predicated region
  $region10: #{eltwise_forward.1} parent=0 // pred_check
    _
  $region11: #{eltwise_forward.1} parent=0 // pred_check_branch
    %20 = sbr.rel (0) target = $region13
  $region12: #{eltwise_forward.1} parent=0 // pred_region
    _
  $region13: #{eltwise_forward.1} parent=0 // pred_fallthru
    _
  // Predicated region
  $region14: #{eltwise_forward.1} parent=0 // pred_check
    _
  $region15: #{eltwise_forward.1} parent=0 // pred_check_branch
    %22 = sbr.rel (0) target = $region17
  $region16: #{eltwise_forward.1} parent=0 // pred_region
    _
  $region17: #{eltwise_forward.1} parent=0 // pred_fallthru
    _

</llo_original>
